<compile_context>
chip_gen: v5e
topology: v5e:2x2
jax: 0.10.0
libtpu: 0.0.40
codegen_flags: <defaults>
</compile_context>

<pallas_src>
import functools
import math

import jax
import jax.numpy as jnp
from jax.experimental import pallas as pl
from jax.experimental.pallas import tpu as pltpu


def _biasfree_ln_kernel(x_ref, w_ref, seg_ref, seg_t_ref, o_ref, *, inv_c, eps):
    # x_ref:     (tm, W)   W = P*C packed lanes (P original rows per packed row)
    # w_ref:     (1, W)    weight tiled P times
    # seg_ref:   (W, P)    0/1 segment matrix (column p selects lanes of row p)
    # seg_t_ref: (P, W)    its transpose (for broadcasting stats back)
    x = x_ref[...]
    xf = x.astype(jnp.float32)
    seg = seg_ref[...]            # f32
    seg_t = seg_t_ref[...]        # f32

    # Single-pass per-segment statistics on the MXU (f32 accumulation).
    s1 = jnp.dot(xf, seg, preferred_element_type=jnp.float32)        # (tm, P) sum(x)
    s2 = jnp.dot(xf * xf, seg, preferred_element_type=jnp.float32)   # (tm, P) sum(x^2)
    mean = s1 * inv_c
    var = jnp.maximum(s2 * inv_c - mean * mean, 0.0)                 # unbiased=False
    inv = jax.lax.rsqrt(var + eps)                                   # EUP slot (~free)

    # Broadcast per-segment inv back across its C lanes via the MXU.
    inv_b = jnp.dot(inv, seg_t, preferred_element_type=jnp.float32)  # (tm, W)
    w = w_ref[...].astype(jnp.float32)                               # (1, W)
    o_ref[...] = (xf * inv_b * w).astype(o_ref.dtype)


def biasfree_layernorm(x, weight, *, eps=1e-5, step_budget_bytes=8 << 20):
    """x: (..., C); weight: (C,). Returns same shape/dtype as x."""
    C = x.shape[-1]
    assert weight.shape == (C,)
    M = x.size // C
    dtype = x.dtype
    itemsize = jnp.dtype(dtype).itemsize

    # --- lane-dense packing for narrow C (free metadata reshape) ---
    pack = (128 // math.gcd(C, 128)) if C < 128 else 1
    if pack > 1 and (pack > 16 or M % pack != 0):
        pack = 1                      # fall back to the plain (M, C) layout
    W = pack * C
    m_rows = M // pack

    x2 = x.reshape(m_rows, W)                                   # no HBM round trip
    w2 = jnp.tile(weight.reshape(1, C), (1, pack))              # (1, W), tiny
    seg = jnp.kron(jnp.eye(pack, dtype=jnp.float32),
                   jnp.ones((C, 1), dtype=jnp.float32))         # (W, pack)
    seg_t = jnp.transpose(seg)                                  # (pack, W)

    # --- byte-budget tile sizing; guarantee >= 4 grid steps when possible ---
    align = 8 if itemsize >= 4 else 16
    tm = max(align, step_budget_bytes // (4 * W * itemsize))    # (in+out) x 2 buffers
    tm = min(tm, max(align, pl.cdiv(m_rows, 4)))                # >= 4 steps for megacore
    if tm >= m_rows:
        tm = m_rows                                             # full-extent block is legal
    else:
        tm = max(align, (tm // align) * align)                  # sublane-aligned tiles
    grid = (pl.cdiv(m_rows, tm),)

    per_step_bytes = 4 * tm * W * itemsize
    vmem_limit = int(min(max(4 * per_step_bytes, 32 << 20), 48 << 20))

    out = pl.pallas_call(
        functools.partial(_biasfree_ln_kernel, inv_c=1.0 / C, eps=eps),
        out_shape=jax.ShapeDtypeStruct((m_rows, W), dtype),
        grid_spec=pltpu.PrefetchScalarGridSpec(
            num_scalar_prefetch=0,
            grid=grid,
            in_specs=[
                pl.BlockSpec((tm, W), lambda i: (i, 0)),
                pl.BlockSpec((1, W), lambda i: (0, 0)),
                pl.BlockSpec((W, pack), lambda i: (0, 0)),
                pl.BlockSpec((pack, W), lambda i: (0, 0)),
            ],
            out_specs=pl.BlockSpec((tm, W), lambda i: (i, 0)),
        ),
        compiler_params=pltpu.CompilerParams(
            dimension_semantics=("parallel",),
            vmem_limit_bytes=vmem_limit,
        ),
    )(x2, w2, seg, seg_t)
    return out.reshape(x.shape)


if __name__ == "__main__":
    # In the arch this LayerNorm is applied to (b, h*w, c) tokens, c = embed_dim = 48.
    B, H, W, C = 2, 16, 16, 48
    L = H * W

    key = jax.random.PRNGKey(0)
    kx, kw = jax.random.split(key)
    x = jax.random.normal(kx, (B, L, C), dtype=jnp.float32)
    # Module init is torch.ones(C); use a non-trivial weight to exercise the scale path.
    weight = 1.0 + 0.1 * jax.random.normal(kw, (C,), dtype=jnp.float32)

    out = biasfree_layernorm(x, weight)
    out = jax.block_until_ready(out)

    # Pure-JAX reference (matches torch: unbiased=False variance, x not centered).
    var = jnp.var(x, axis=-1, keepdims=True)
    ref = x / jnp.sqrt(var + 1e-5) * weight

    assert out.shape == x.shape and out.dtype == x.dtype
    assert jnp.allclose(out, ref, atol=1e-4, rtol=1e-4)

    print("KERNEL_OK")
</pallas_src>

<mosaic_0001>
module attributes {stable_mosaic.version = 11 : i64} {
  func.func @_biasfree_ln_kernel(%arg0: i32, %arg1: memref<16x384xf32, #tpu.memory_space<vmem>>, %arg2: memref<1x384xf32, #tpu.memory_space<vmem>>, %arg3: memref<384x8xf32, #tpu.memory_space<vmem>>, %arg4: memref<8x384xf32, #tpu.memory_space<vmem>>, %arg5: memref<16x384xf32, #tpu.memory_space<vmem>>) attributes {dimension_semantics = [#tpu.dimension_semantics<parallel>], iteration_bounds = array<i64: 4>, scalar_prefetch = 0 : i64, scratch_operands = 0 : i64, tpu.core_type = #tpu.core_type<tc>, window_params = [{transform_indices = @transform_0, window_bounds = array<i64: 16, 384>}, {pipeline_mode = #tpu.pipeline_mode<synchronous>, transform_indices = @transform_1, window_bounds = array<i64: 1, 384>}, {pipeline_mode = #tpu.pipeline_mode<synchronous>, transform_indices = @transform_2, window_bounds = array<i64: 384, 8>}, {pipeline_mode = #tpu.pipeline_mode<synchronous>, transform_indices = @transform_3, window_bounds = array<i64: 8, 384>}, {transform_indices = @transform_4, window_bounds = array<i64: 16, 384>}]} {
    %c0 = arith.constant 0 : index
    %c0_0 = arith.constant 0 : index
    %0 = vector.load %arg1[%c0, %c0_0] : memref<16x384xf32, #tpu.memory_space<vmem>>, vector<16x384xf32>
    %c0_1 = arith.constant 0 : index
    %c0_2 = arith.constant 0 : index
    %1 = vector.load %arg3[%c0_1, %c0_2] : memref<384x8xf32, #tpu.memory_space<vmem>>, vector<384x8xf32>
    %c0_3 = arith.constant 0 : index
    %c0_4 = arith.constant 0 : index
    %2 = vector.load %arg4[%c0_3, %c0_4] : memref<8x384xf32, #tpu.memory_space<vmem>>, vector<8x384xf32>
    %cst = arith.constant dense<0.000000e+00> : vector<16x8xf32>
    %3 = tpu.matmul %0, %1, %cst {dimension_numbers = #tpu.dot_dimension_numbers<[1], [0], [0], [1], [0, 0, 1, 1], [], []>} : vector<16x384xf32>, vector<384x8xf32>, vector<16x8xf32> -> vector<16x8xf32>
    %4 = arith.mulf %0, %0 : vector<16x384xf32>
    %cst_5 = arith.constant dense<0.000000e+00> : vector<16x8xf32>
    %5 = tpu.matmul %4, %1, %cst_5 {dimension_numbers = #tpu.dot_dimension_numbers<[1], [0], [0], [1], [0, 0, 1, 1], [], []>} : vector<16x384xf32>, vector<384x8xf32>, vector<16x8xf32> -> vector<16x8xf32>
    %cst_6 = arith.constant 0.020833334 : f32
    %6 = vector.broadcast %cst_6 : f32 to vector<16x8xf32>
    %7 = arith.mulf %3, %6 : vector<16x8xf32>
    %cst_7 = arith.constant 0.020833334 : f32
    %8 = vector.broadcast %cst_7 : f32 to vector<16x8xf32>
    %9 = arith.mulf %5, %8 : vector<16x8xf32>
    %10 = arith.mulf %7, %7 : vector<16x8xf32>
    %11 = arith.subf %9, %10 : vector<16x8xf32>
    %cst_8 = arith.constant 0.000000e+00 : f32
    %12 = vector.broadcast %cst_8 : f32 to vector<16x8xf32>
    %13 = arith.maximumf %11, %12 : vector<16x8xf32>
    %cst_9 = arith.constant 9.99999974E-6 : f32
    %14 = vector.broadcast %cst_9 : f32 to vector<16x8xf32>
    %15 = arith.addf %13, %14 : vector<16x8xf32>
    %16 = math.rsqrt %15 : vector<16x8xf32>
    %cst_10 = arith.constant dense<0.000000e+00> : vector<16x384xf32>
    %17 = tpu.matmul %16, %2, %cst_10 {dimension_numbers = #tpu.dot_dimension_numbers<[1], [0], [0], [1], [0, 0, 1, 1], [], []>} : vector<16x8xf32>, vector<8x384xf32>, vector<16x384xf32> -> vector<16x384xf32>
    %c0_11 = arith.constant 0 : index
    %c0_12 = arith.constant 0 : index
    %18 = vector.load %arg2[%c0_11, %c0_12] : memref<1x384xf32, #tpu.memory_space<vmem>>, vector<1x384xf32>
    %19 = arith.mulf %0, %17 : vector<16x384xf32>
    %20 = vector.broadcast %18 : vector<1x384xf32> to vector<16x384xf32>
    %21 = arith.mulf %19, %20 : vector<16x384xf32>
    %c0_13 = arith.constant 0 : index
    %c0_14 = arith.constant 0 : index
    %22 = vector.load %arg5[%c0_13, %c0_14] : memref<16x384xf32, #tpu.memory_space<vmem>>, vector<16x384xf32>
    tpu.vector_store %arg5[%c0_13, %c0_14], %21 {strides = array<i32>} : memref<16x384xf32, #tpu.memory_space<vmem>>, vector<16x384xf32>,
    return
  }
  func.func @transform_0(%arg0: i32) -> (i32, i32) {
    %c0_i32 = arith.constant 0 : i32
    %c0_i32_0 = arith.constant 0 : i32
    return %arg0, %c0_i32 : i32, i32
  }
  func.func @transform_1(%arg0: i32) -> (i32, i32) {
    %c0_i32 = arith.constant 0 : i32
    %c0_i32_0 = arith.constant 0 : i32
    %c0_i32_1 = arith.constant 0 : i32
    return %c0_i32, %c0_i32_0 : i32, i32
  }
  func.func @transform_2(%arg0: i32) -> (i32, i32) {
    %c0_i32 = arith.constant 0 : i32
    %c0_i32_0 = arith.constant 0 : i32
    %c0_i32_1 = arith.constant 0 : i32
    return %c0_i32, %c0_i32_0 : i32, i32
  }
  func.func @transform_3(%arg0: i32) -> (i32, i32) {
    %c0_i32 = arith.constant 0 : i32
    %c0_i32_0 = arith.constant 0 : i32
    %c0_i32_1 = arith.constant 0 : i32
    return %c0_i32, %c0_i32_0 : i32, i32
  }
  func.func @transform_4(%arg0: i32) -> (i32, i32) {
    %c0_i32 = arith.constant 0 : i32
    %c0_i32_0 = arith.constant 0 : i32
    return %arg0, %c0_i32 : i32, i32
  }
}

</mosaic_0001>

<llo_original>
// kernel: tpu_custom_call.1
$region0: #{tpu_custom_call.1}
  #allocation0 [shape = 'u32[]', space=smem, size = 0x4, offset = 0x4, fixed_abs, tag = 'smem constant byte address 0x4 - core index']
  #allocation1 [shape = 'u32[72,128]{1,0:T(1,128)}', space=vmem, size = 0x9000, scoped, tag = 'internal scratch']
  %s0 = inlined_call_operand.vmem [shape: f32[64,384], index: 0, kind: input, shape index: {}]
  %s1 = inlined_call_operand.vmem [shape: f32[1,384], index: 1, kind: input, shape index: {}]
  %s2 = inlined_call_operand.vmem [shape: f32[384,8], index: 2, kind: input, shape index: {}]
  %s3 = inlined_call_operand.vmem [shape: f32[8,384], index: 3, kind: input, shape index: {}]
  %s4 = inlined_call_operand.hbm [shape: f32[64,384], index: 4, kind: output, shape index: {}]
  %s5 = sld [smem:[#allocation0]]
  $region49: #{tpu_custom_call.1} parent=0
    _
  %s7 = ssub.s32 1, %s5
  %s8 = scalar_select 0, %s7, %s5
  $region1: #{tpu_custom_call.1} parent=0
    #allocation2 [shape = 'u8[49152]{0}', space=vmem, size = 0xc000, scoped, tag = 'output window, operand 0']
    #allocation3 [shape = 's32[2]{0}', space=sflag, size = 0x8, scoped, tag = 'scoped memory for tpu_custom_call.1']
    %9 = vsyncpa [#allocation3], 0
    %s10 = scalar_lea.sflag [#allocation3], 1
    %11 = vsyncpa %s10, 0
    loop: start=0, step=1, limit=6
    $region2: #{tpu_custom_call.1} parent=1 // loop_pre_header
      _
    $region3: #{tpu_custom_call.1} parent=1 // loop_header
      %s13 = sphi 0, %s17
      %p14 = scmp.ge.s32.totalorder %s13, 6
      %s23 = sphi 0, %s25
      %s26 = sphi 0, %s23
      %s27 = sphi 0, %s26
      %s43 = sphi 0, %s27
      %s47 = sphi 0, %s47
      %s49 = sphi 0, %s47
      %s50 = sphi 0, %s49
      %s64 = sphi 0, %s50
      %s68 = sphi 0, %s68
      %s70 = sphi 0, %s68
      %s71 = sphi 0, %s70
      %s85 = sphi 0, %s71
      %s89 = sphi 0, %s89
      %s91 = sphi 0, %s89
      %s92 = sphi 0, %s91
      %s106 = sphi 0, %s92
      %s112 = sphi 0, %s114
      %s115 = sphi 0, %s112
      %s116 = sphi 0, %s115
      %s132 = sphi 0, %s116
    $region4: #{tpu_custom_call.1} parent=1 // loop_header_branch
      %16 = sbr.rel (%p14) target = $region8
    $region5: #{tpu_custom_call.1} parent=1 // loop_body
      %s18 = ssub.s32 %s13, 1
      %s19 = ssub.s32 %s13, 2
      %s20 = sadd.s32 %s13, 1
      %s21 = ssub.s32 %s13, %s20
      %p22 = scmp.eq.s32.totalorder %s21, 0
      %s24 = sadd.s32 %s23, 1
      %s25 = scalar_select %p22, %s23, %s24
      %p28 = pneg %p22
      %p29 = scmp.eq.s32.totalorder %s13, 3
      %p30 = por %p28, %p29
      %p31 = scmp.ne.s32.totalorder %s23, %s26
      %p32 = scmp.eq.s32.totalorder %s13, 0
      %p33 = por %p31, %p32
      %p34 = scmp.ne.s32.totalorder %s23, %s26
      %p35 = scmp.eq.s32.totalorder %s18, 3
      %p36 = por %p34, %p35
      %p37 = scmp.ne.s32.totalorder %s26, %s27
      %p38 = scmp.eq.s32.totalorder %s18, 0
      %p39 = por %p37, %p38
      %p40 = scmp.ne.s32.totalorder %s26, %s27
      %p41 = scmp.eq.s32.totalorder %s19, 3
      %p42 = por %p40, %p41
      %p44 = scmp.ne.s32.totalorder %s27, %s43
      %p45 = scmp.eq.s32.totalorder %s19, 0
      %p46 = por %p44, %p45
      %s48 = sadd.s32 %s47, 1
      %p51 = scmp.eq.s32.totalorder %s13, 3
      %p52 = scmp.ne.s32.totalorder %s47, %s49
      %p53 = scmp.eq.s32.totalorder %s13, 0
      %p54 = por %p52, %p53
      %p55 = scmp.ne.s32.totalorder %s47, %s49
      %p56 = scmp.eq.s32.totalorder %s18, 3
      %p57 = por %p55, %p56
      %p58 = scmp.ne.s32.totalorder %s49, %s50
      %p59 = scmp.eq.s32.totalorder %s18, 0
      %p60 = por %p58, %p59
      %p61 = scmp.ne.s32.totalorder %s49, %s50
      %p62 = scmp.eq.s32.totalorder %s19, 3
      %p63 = por %p61, %p62
      %p65 = scmp.ne.s32.totalorder %s50, %s64
      %p66 = scmp.eq.s32.totalorder %s19, 0
      %p67 = por %p65, %p66
      %s69 = sadd.s32 %s68, 1
      %p72 = scmp.eq.s32.totalorder %s13, 3
      %p73 = scmp.ne.s32.totalorder %s68, %s70
      %p74 = scmp.eq.s32.totalorder %s13, 0
      %p75 = por %p73, %p74
      %p76 = scmp.ne.s32.totalorder %s68, %s70
      %p77 = scmp.eq.s32.totalorder %s18, 3
      %p78 = por %p76, %p77
      %p79 = scmp.ne.s32.totalorder %s70, %s71
      %p80 = scmp.eq.s32.totalorder %s18, 0
      %p81 = por %p79, %p80
      %p82 = scmp.ne.s32.totalorder %s70, %s71
      %p83 = scmp.eq.s32.totalorder %s19, 3
      %p84 = por %p82, %p83
      %p86 = scmp.ne.s32.totalorder %s71, %s85
      %p87 = scmp.eq.s32.totalorder %s19, 0
      %p88 = por %p86, %p87
      %s90 = sadd.s32 %s89, 1
      %p93 = scmp.eq.s32.totalorder %s13, 3
      %p94 = scmp.ne.s32.totalorder %s89, %s91
      %p95 = scmp.eq.s32.totalorder %s13, 0
      %p96 = por %p94, %p95
      %p97 = scmp.ne.s32.totalorder %s89, %s91
      %p98 = scmp.eq.s32.totalorder %s18, 3
      %p99 = por %p97, %p98
      %p100 = scmp.ne.s32.totalorder %s91, %s92
      %p101 = scmp.eq.s32.totalorder %s18, 0
      %p102 = por %p100, %p101
      %p103 = scmp.ne.s32.totalorder %s91, %s92
      %p104 = scmp.eq.s32.totalorder %s19, 3
      %p105 = por %p103, %p104
      %p107 = scmp.ne.s32.totalorder %s92, %s106
      %p108 = scmp.eq.s32.totalorder %s19, 0
      %p109 = por %p107, %p108
      %s110 = ssub.s32 %s13, %s20
      %p111 = scmp.eq.s32.totalorder %s110, 0
      %s113 = sadd.s32 %s112, 1
      %s114 = scalar_select %p111, %s112, %s113
      %p117 = pneg %p111
      %p118 = scmp.eq.s32.totalorder %s13, 3
      %p119 = por %p117, %p118
      %p120 = scmp.ne.s32.totalorder %s112, %s115
      %p121 = scmp.eq.s32.totalorder %s13, 0
      %p122 = por %p120, %p121
      %p123 = scmp.ne.s32.totalorder %s112, %s115
      %p124 = scmp.eq.s32.totalorder %s18, 3
      %p125 = por %p123, %p124
      %p126 = scmp.ne.s32.totalorder %s115, %s116
      %p127 = scmp.eq.s32.totalorder %s18, 0
      %p128 = por %p126, %p127
      %p129 = scmp.ne.s32.totalorder %s115, %s116
      %p130 = scmp.eq.s32.totalorder %s19, 3
      %p131 = por %p129, %p130
      %p133 = scmp.ne.s32.totalorder %s116, %s132
      %p134 = scmp.eq.s32.totalorder %s19, 0
      %p135 = por %p133, %p134
      %p136 = scmp.le.s32.totalorder 1, %s13
      %p137 = scmp.lt.s32.totalorder %s13, 5
      %p138 = pnand %p136, %p137
      %p139 = pneg %p138
      // Predicated region
      $region9: #{tpu_custom_call.1} parent=5 // pred_check
        _
      $region10: #{tpu_custom_call.1} parent=5 // pred_check_branch
        %141 = sbr.rel (%p138) target = $region12
      $region11: #{tpu_custom_call.1} parent=5 // pred_region
        %s142 = ssub.s32 %s13, 1
        // Predicated region
        $region13: #{tpu_custom_call.1} parent=11 // pred_check
          %p143 = pneg %p60
        $region14: #{tpu_custom_call.1} parent=11 // pred_check_branch
          %145 = sbr.rel (%p143) target = $region16
        $region15: #{tpu_custom_call.1} parent=11 // pred_region
          _
        $region16: #{tpu_custom_call.1} parent=11 // pred_fallthru
          _
        // Predicated region
        $region17: #{tpu_custom_call.1} parent=11 // pred_check
          %p146 = pneg %p81
        $region18: #{tpu_custom_call.1} parent=11 // pred_check_branch
          %148 = sbr.rel (%p146) target = $region20
        $region19: #{tpu_custom_call.1} parent=11 // pred_region
          _
        $region20: #{tpu_custom_call.1} parent=11 // pred_fallthru
          _
        // Predicated region
        $region21: #{tpu_custom_call.1} parent=11 // pred_check
          %p149 = pneg %p102
        $region22: #{tpu_custom_call.1} parent=11 // pred_check_branch
          %151 = sbr.rel (%p149) target = $region24
        $region23: #{tpu_custom_call.1} parent=11 // pred_region
          _
        $region24: #{tpu_custom_call.1} parent=11 // pred_fallthru
          _
      $region12: #{tpu_custom_call.1} parent=5 // pred_fallthru
        _
      %p152 = scmp.lt.s32.totalorder %s13, 4
      // Predicated region
      $region25: #{tpu_custom_call.1} parent=5 // pred_check
        %p153 = pneg %p152
      $region26: #{tpu_custom_call.1} parent=5 // pred_check_branch
        %155 = sbr.rel (%p153) target = $region28
      $region27: #{tpu_custom_call.1} parent=5 // pred_region
        // Predicated region
        $region29: #{tpu_custom_call.1} parent=27 // pred_check
          %p156 = pneg %p33
        $region30: #{tpu_custom_call.1} parent=27 // pred_check_branch
          %158 = sbr.rel (%p156) target = $region32
        $region31: #{tpu_custom_call.1} parent=27 // pred_region
          %s159 = smul.u32 2, %s13
          %p160 = scmp.lt.s32.totalorder %s159, 7
          %s161 = scalar_select %p160, %s159, 7
          %s162 = smul.addr %s161, 3
          %s163 = smul.addr %s162, 8
          %s164 = scalar_lea.vmem %s0, %s163
          %s165 = smul.u32 2, %s13
        $region32: #{tpu_custom_call.1} parent=27 // pred_fallthru
          _
      $region28: #{tpu_custom_call.1} parent=5 // pred_fallthru
        _
      %p166 = scmp.le.s32.totalorder 1, %s13
      %p167 = scmp.lt.s32.totalorder %s13, 5
      %p168 = pnand %p166, %p167
      %p169 = pneg %p168
      // Predicated region
      $region33: #{tpu_custom_call.1} parent=5 // pred_check
        _
      $region34: #{tpu_custom_call.1} parent=5 // pred_check_branch
        %171 = sbr.rel (%p168) target = $region36
      $region35: #{tpu_custom_call.1} parent=5 // pred_region
        %s172 = ssub.s32 %s13, 1
        %s173 = smul.u32 2, %s18
        %p174 = scmp.lt.s32.totalorder %s173, 7
        %s175 = scalar_select %p174, %s173, 7
        %s176 = smul.addr %s175, 3
        %s177 = smul.addr %s176, 8
        %s178 = scalar_lea.vmem %s0, %s177
        %p179 = pneg %p39
        %p180 = pneg %p36
        %p181 = pneg %p60
        %p182 = pneg %p57
        %p183 = pneg %p81
        %p184 = pneg %p78
        %p185 = pneg %p102
        %p186 = pneg %p99
        %p187 = pneg %p128
        %p188 = pneg %p125
        %s189 = sand.u32 %s115, 1
        %s190 = scalar_lea.sflag [#allocation3], %s189
        %s191 = sand.u32 %s115, 1
        %s192 = smul.addr %s191, 48
        %s193 = scalar_lea.vmem [#allocation2], %s192
        %s194 = smul.u32 2, %s18
        %p195 = scmp.lt.s32.totalorder %s194, 7
        %s196 = scalar_select %p195, %s194, 7
        %s197 = smul.addr %s196, 3
        %s198 = smul.addr %s197, 8
        %s199 = scalar_lea.vmem %s0, %s198
        %s200 = smul.u32 2, %s18
        %s201 = smul.u32 2, %s18
        %v202 = vld [vmem:[%s199] sm:$0xff]
        %v203 = vld [vmem:[%s199 + $0x8] sm:$0xff]
        %v204 = vld [vmem:[%s199 + $0x10] sm:$0xff]
        %v205 = vld [vmem:[%s199 + $0x18] sm:$0xff]
        %v206 = vld [vmem:[%s199 + $0x20] sm:$0xff]
        %v207 = vld [vmem:[%s199 + $0x28] sm:$0xff]
        %v208 = vld [vmem:[%s2] sm:$0xff]
        %v209 = vld [vmem:[%s2 + $0x8] sm:$0xff]
        %v210 = vld [vmem:[%s2 + $0x10] sm:$0xff]
        %v211 = vld [vmem:[%s2 + $0x18] sm:$0xff]
        %v212 = vld [vmem:[%s2 + $0x20] sm:$0xff]
        %v213 = vld [vmem:[%s2 + $0x28] sm:$0xff]
        %v214 = vld [vmem:[%s2 + $0x30] sm:$0xff]
        %v215 = vld [vmem:[%s2 + $0x38] sm:$0xff]
        %v216 = vld [vmem:[%s2 + $0x40] sm:$0xff]
        %v217 = vld [vmem:[%s2 + $0x48] sm:$0xff]
        %v218 = vld [vmem:[%s2 + $0x50] sm:$0xff]
        %v219 = vld [vmem:[%s2 + $0x58] sm:$0xff]
        %v220 = vld [vmem:[%s2 + $0x60] sm:$0xff]
        %v221 = vld [vmem:[%s2 + $0x68] sm:$0xff]
        %v222 = vld [vmem:[%s2 + $0x70] sm:$0xff]
        %v223 = vld [vmem:[%s2 + $0x78] sm:$0xff]
        %v224 = vld [vmem:[%s2 + $0x80] sm:$0xff]
        %v225 = vld [vmem:[%s2 + $0x88] sm:$0xff]
        %v226 = vld [vmem:[%s2 + $0x90] sm:$0xff]
        %v227 = vld [vmem:[%s2 + $0x98] sm:$0xff]
        %v228 = vld [vmem:[%s2 + $0xa0] sm:$0xff]
        %v229 = vld [vmem:[%s2 + $0xa8] sm:$0xff]
        %v230 = vld [vmem:[%s2 + $0xb0] sm:$0xff]
        %v231 = vld [vmem:[%s2 + $0xb8] sm:$0xff]
        %v232 = vld [vmem:[%s2 + $0xc0] sm:$0xff]
        %v233 = vld [vmem:[%s2 + $0xc8] sm:$0xff]
        %v234 = vld [vmem:[%s2 + $0xd0] sm:$0xff]
        %v235 = vld [vmem:[%s2 + $0xd8] sm:$0xff]
        %v236 = vld [vmem:[%s2 + $0xe0] sm:$0xff]
        %v237 = vld [vmem:[%s2 + $0xe8] sm:$0xff]
        %v238 = vld [vmem:[%s2 + $0xf0] sm:$0xff]
        %v239 = vld [vmem:[%s2 + $0xf8] sm:$0xff]
        %v240 = vld [vmem:[%s2 + $0x100] sm:$0xff]
        %v241 = vld [vmem:[%s2 + $0x108] sm:$0xff]
        %v242 = vld [vmem:[%s2 + $0x110] sm:$0xff]
        %v243 = vld [vmem:[%s2 + $0x118] sm:$0xff]
        %v244 = vld [vmem:[%s2 + $0x120] sm:$0xff]
        %v245 = vld [vmem:[%s2 + $0x128] sm:$0xff]
        %v246 = vld [vmem:[%s2 + $0x130] sm:$0xff]
        %v247 = vld [vmem:[%s2 + $0x138] sm:$0xff]
        %v248 = vld [vmem:[%s2 + $0x140] sm:$0xff]
        %v249 = vld [vmem:[%s2 + $0x148] sm:$0xff]
        %v250 = vld [vmem:[%s2 + $0x150] sm:$0xff]
        %v251 = vld [vmem:[%s2 + $0x158] sm:$0xff]
        %v252 = vld [vmem:[%s2 + $0x160] sm:$0xff]
        %v253 = vld [vmem:[%s2 + $0x168] sm:$0xff]
        %v254 = vld [vmem:[%s2 + $0x170] sm:$0xff]
        %v255 = vld [vmem:[%s2 + $0x178] sm:$0xff]
        %v256 = vld [vmem:[%s3] sm:$0xff]
        %v257 = vld [vmem:[%s3 + $0x8] sm:$0xff]
        %v258 = vld [vmem:[%s3 + $0x10] sm:$0xff]
        %259 = vmatpush.msra.mxu0 %v223
        %260 = vmatpush.msra.mxu0 %v222
        %261 = vmatpush.msra.mxu0 %v221
        %262 = vmatpush.msra.mxu0 %v220
        %263 = vmatpush.msra.mxu0 %v219
        %264 = vmatpush.msra.mxu0 %v218
        %265 = vmatpush.msra.mxu0 %v217
        %266 = vmatpush.msra.mxu0 %v216
        %267 = vmatpush.msra.mxu0 %v215
        %268 = vmatpush.msra.mxu0 %v214
        %269 = vmatpush.msra.mxu0 %v213
        %270 = vmatpush.msra.mxu0 %v212
        %271 = vmatpush.msra.mxu0 %v211
        %272 = vmatpush.msra.mxu0 %v210
        %273 = vmatpush.msra.mxu0 %v209
        %274 = vmatpush.msra.mxu0 %v208
        %275 = vmatmul.f32.gmra.mxu0 %v202
        %v276 = vpop.f32.mrf.mxu0
        %v277 = vadd.f32 0.0, %v276
        %278 = vmatmul.f32.gmra.mxu0 %v205
        %v279 = vpop.f32.mrf.mxu0
        %v280 = vadd.f32 0.0, %v279
        %281 = vdwg.mxu0
        %282 = vmatpush.msra.mxu0 %v239
        %283 = vmatpush.msra.mxu0 %v238
        %284 = vmatpush.msra.mxu0 %v237
        %285 = vmatpush.msra.mxu0 %v236
        %286 = vmatpush.msra.mxu0 %v235
        %287 = vmatpush.msra.mxu0 %v234
        %288 = vmatpush.msra.mxu0 %v233
        %289 = vmatpush.msra.mxu0 %v232
        %290 = vmatpush.msra.mxu0 %v231
        %291 = vmatpush.msra.mxu0 %v230
        %292 = vmatpush.msra.mxu0 %v229
        %293 = vmatpush.msra.mxu0 %v228
        %294 = vmatpush.msra.mxu0 %v227
        %295 = vmatpush.msra.mxu0 %v226
        %296 = vmatpush.msra.mxu0 %v225
        %297 = vmatpush.msra.mxu0 %v224
        %298 = vmatmul.f32.gmra.mxu0 %v203
        %v299 = vpop.f32.mrf.mxu0
        %v300 = vadd.f32 %v277, %v299
        %301 = vmatmul.f32.gmra.mxu0 %v206
        %v302 = vpop.f32.mrf.mxu0
        %v303 = vadd.f32 %v280, %v302
        %304 = vdwg.mxu0
        %305 = vmatpush.msra.mxu0 %v255
        %306 = vmatpush.msra.mxu0 %v254
        %307 = vmatpush.msra.mxu0 %v253
        %308 = vmatpush.msra.mxu0 %v252
        %309 = vmatpush.msra.mxu0 %v251
        %310 = vmatpush.msra.mxu0 %v250
        %311 = vmatpush.msra.mxu0 %v249
        %312 = vmatpush.msra.mxu0 %v248
        %313 = vmatpush.msra.mxu0 %v247
        %314 = vmatpush.msra.mxu0 %v246
        %315 = vmatpush.msra.mxu0 %v245
        %316 = vmatpush.msra.mxu0 %v244
        %317 = vmatpush.msra.mxu0 %v243
        %318 = vmatpush.msra.mxu0 %v242
        %319 = vmatpush.msra.mxu0 %v241
        %320 = vmatpush.msra.mxu0 %v240
        %321 = vmatmul.f32.gmra.mxu0 %v204
        %v322 = vpop.f32.mrf.mxu0
        %v323 = vadd.f32 %v300, %v322
        %324 = vmatmul.f32.gmra.mxu0 %v207
        %v325 = vpop.f32.mrf.mxu0
        %v326 = vadd.f32 %v303, %v325
        %327 = vdwg.mxu0
        %v328 = vmul.f32 %v202, %v202
        %v329 = vmul.f32 %v203, %v203
        %v330 = vmul.f32 %v204, %v204
        %v331 = vmul.f32 %v205, %v205
        %v332 = vmul.f32 %v206, %v206
        %v333 = vmul.f32 %v207, %v207
        %334 = vmatpush.msra.mxu0 %v223
        %335 = vmatpush.msra.mxu0 %v222
        %336 = vmatpush.msra.mxu0 %v221
        %337 = vmatpush.msra.mxu0 %v220
        %338 = vmatpush.msra.mxu0 %v219
        %339 = vmatpush.msra.mxu0 %v218
        %340 = vmatpush.msra.mxu0 %v217
        %341 = vmatpush.msra.mxu0 %v216
        %342 = vmatpush.msra.mxu0 %v215
        %343 = vmatpush.msra.mxu0 %v214
        %344 = vmatpush.msra.mxu0 %v213
        %345 = vmatpush.msra.mxu0 %v212
        %346 = vmatpush.msra.mxu0 %v211
        %347 = vmatpush.msra.mxu0 %v210
        %348 = vmatpush.msra.mxu0 %v209
        %349 = vmatpush.msra.mxu0 %v208
        %350 = vmatmul.f32.gmra.mxu0 %v328
        %v351 = vpop.f32.mrf.mxu0
        %v352 = vadd.f32 0.0, %v351
        %353 = vmatmul.f32.gmra.mxu0 %v331
        %v354 = vpop.f32.mrf.mxu0
        %v355 = vadd.f32 0.0, %v354
        %356 = vdwg.mxu0
        %357 = vmatpush.msra.mxu0 %v239
        %358 = vmatpush.msra.mxu0 %v238
        %359 = vmatpush.msra.mxu0 %v237
        %360 = vmatpush.msra.mxu0 %v236
        %361 = vmatpush.msra.mxu0 %v235
        %362 = vmatpush.msra.mxu0 %v234
        %363 = vmatpush.msra.mxu0 %v233
        %364 = vmatpush.msra.mxu0 %v232
        %365 = vmatpush.msra.mxu0 %v231
        %366 = vmatpush.msra.mxu0 %v230
        %367 = vmatpush.msra.mxu0 %v229
        %368 = vmatpush.msra.mxu0 %v228
        %369 = vmatpush.msra.mxu0 %v227
        %370 = vmatpush.msra.mxu0 %v226
        %371 = vmatpush.msra.mxu0 %v225
        %372 = vmatpush.msra.mxu0 %v224
        %373 = vmatmul.f32.gmra.mxu0 %v329
        %v374 = vpop.f32.mrf.mxu0
        %v375 = vadd.f32 %v352, %v374
        %376 = vmatmul.f32.gmra.mxu0 %v332
        %v377 = vpop.f32.mrf.mxu0
        %v378 = vadd.f32 %v355, %v377
        %379 = vdwg.mxu0
        %380 = vmatpush.msra.mxu0 %v255
        %381 = vmatpush.msra.mxu0 %v254
        %382 = vmatpush.msra.mxu0 %v253
        %383 = vmatpush.msra.mxu0 %v252
        %384 = vmatpush.msra.mxu0 %v251
        %385 = vmatpush.msra.mxu0 %v250
        %386 = vmatpush.msra.mxu0 %v249
        %387 = vmatpush.msra.mxu0 %v248
        %388 = vmatpush.msra.mxu0 %v247
        %389 = vmatpush.msra.mxu0 %v246
        %390 = vmatpush.msra.mxu0 %v245
        %391 = vmatpush.msra.mxu0 %v244
        %392 = vmatpush.msra.mxu0 %v243
        %393 = vmatpush.msra.mxu0 %v242
        %394 = vmatpush.msra.mxu0 %v241
        %395 = vmatpush.msra.mxu0 %v240
        %396 = vmatmul.f32.gmra.mxu0 %v330
        %v397 = vpop.f32.mrf.mxu0
        %v398 = vadd.f32 %v375, %v397
        %399 = vmatmul.f32.gmra.mxu0 %v333
        %v400 = vpop.f32.mrf.mxu0
        %v401 = vadd.f32 %v378, %v400
        %402 = vdwg.mxu0
        %v403 = vmul.f32 %v323, 0.020833334
        %v404 = vmul.f32 %v326, 0.020833334
        %v405 = vmul.f32 %v398, 0.020833334
        %v406 = vmul.f32 %v401, 0.020833334
        %v407 = vmul.f32 %v403, %v403
        %v408 = vmul.f32 %v404, %v404
        %v409 = vsub.f32 %v405, %v407
        %v410 = vsub.f32 %v406, %v408
        %v411 = vmax.f32 %v409, 0.0
        %v412 = vmax.f32 %v410, 0.0
        %v413 = vadd.f32 %v411, 1e-05
        %v414 = vadd.f32 %v412, 1e-05
        %v415 = vrsqrt.pop %v413
        %v416 = vmul.f32 %v415, %v413
        %v417 = vmul.f32 %v416, %v415
        %v418 = vmul.f32 0.5, %v417
        %v419 = vsub.f32 1.5, %v418
        %v420 = vmul.f32 %v415, %v419
        %vm421 = vweird.f32 %v413
        %vm422 = vweird.f32 %v415
        %vm423 = vmor %vm421, %vm422
        %v424 = vsel %vm423, %v415, %v420
        %v425 = vrsqrt.pop %v414
        %v426 = vmul.f32 %v425, %v414
        %v427 = vmul.f32 %v426, %v425
        %v428 = vmul.f32 0.5, %v427
        %v429 = vsub.f32 1.5, %v428
        %v430 = vmul.f32 %v425, %v429
        %vm431 = vweird.f32 %v414
        %vm432 = vweird.f32 %v425
        %vm433 = vmor %vm431, %vm432
        %v434 = vsel %vm433, %v425, %v430
        %vm435 = vcmask 64512
        %v437 = vsel %vm435, %v424, 0
        %v440 = vsel %vm435, %v434, 0
        %442 = vmatpush.msra.mxu0 0.0
        %443 = vmatpush.msra.mxu0 0.0
        %444 = vmatpush.msra.mxu0 0.0
        %445 = vmatpush.msra.mxu0 0.0
        %446 = vmatpush.msra.mxu0 0.0
        %447 = vmatpush.msra.mxu0 0.0
        %448 = vmatpush.msra.mxu0 0.0
        %449 = vmatpush.msra.mxu0 0.0
        %450 = vmatpush.msra.mxu0 0.0
        %451 = vmatpush.msra.mxu0 0.0
        %452 = vmatpush.msra.mxu0 0.0
        %453 = vmatpush.msra.mxu0 0.0
        %454 = vmatpush.msra.mxu0 0.0
        %455 = vmatpush.msra.mxu0 0.0
        %456 = vmatpush.msra.mxu0 0.0
        %457 = vmatpush.msra.mxu0 %v256
        %458 = vmatmul.f32.gmra.mxu0 %v437
        %v459 = vpop.f32.mrf.mxu0
        %v460 = vadd.f32 0.0, %v459
        %461 = vmatmul.f32.gmra.mxu0 %v440
        %v462 = vpop.f32.mrf.mxu0
        %v463 = vadd.f32 0.0, %v462
        %464 = vdwg.mxu0
        %465 = vmatpush.msra.mxu0 0.0
        %466 = vmatpush.msra.mxu0 0.0
        %467 = vmatpush.msra.mxu0 0.0
        %468 = vmatpush.msra.mxu0 0.0
        %469 = vmatpush.msra.mxu0 0.0
        %470 = vmatpush.msra.mxu0 0.0
        %471 = vmatpush.msra.mxu0 0.0
        %472 = vmatpush.msra.mxu0 0.0
        %473 = vmatpush.msra.mxu0 0.0
        %474 = vmatpush.msra.mxu0 0.0
        %475 = vmatpush.msra.mxu0 0.0
        %476 = vmatpush.msra.mxu0 0.0
        %477 = vmatpush.msra.mxu0 0.0
        %478 = vmatpush.msra.mxu0 0.0
        %479 = vmatpush.msra.mxu0 0.0
        %480 = vmatpush.msra.mxu0 %v257
        %481 = vmatmul.f32.gmra.mxu0 %v437
        %v482 = vpop.f32.mrf.mxu0
        %v483 = vadd.f32 0.0, %v482
        %484 = vmatmul.f32.gmra.mxu0 %v440
        %v485 = vpop.f32.mrf.mxu0
        %v486 = vadd.f32 0.0, %v485
        %487 = vdwg.mxu0
        %488 = vmatpush.msra.mxu0 0.0
        %489 = vmatpush.msra.mxu0 0.0
        %490 = vmatpush.msra.mxu0 0.0
        %491 = vmatpush.msra.mxu0 0.0
        %492 = vmatpush.msra.mxu0 0.0
        %493 = vmatpush.msra.mxu0 0.0
        %494 = vmatpush.msra.mxu0 0.0
        %495 = vmatpush.msra.mxu0 0.0
        %496 = vmatpush.msra.mxu0 0.0
        %497 = vmatpush.msra.mxu0 0.0
        %498 = vmatpush.msra.mxu0 0.0
        %499 = vmatpush.msra.mxu0 0.0
        %500 = vmatpush.msra.mxu0 0.0
        %501 = vmatpush.msra.mxu0 0.0
        %502 = vmatpush.msra.mxu0 0.0
        %503 = vmatpush.msra.mxu0 %v258
        %504 = vmatmul.f32.gmra.mxu0 %v437
        %v505 = vpop.f32.mrf.mxu0
        %v506 = vadd.f32 0.0, %v505
        %507 = vmatmul.f32.gmra.mxu0 %v440
        %v508 = vpop.f32.mrf.mxu0
        %v509 = vadd.f32 0.0, %v508
        %510 = vdwg.mxu0
        %v511 = vld [vmem:[%s1] sm:$0x7]
        %v512 = vmul.f32 %v202, %v460
        %v513 = vmul.f32 %v203, %v483
        %v514 = vmul.f32 %v204, %v506
        %v515 = vmul.f32 %v205, %v463
        %v516 = vmul.f32 %v206, %v486
        %v517 = vmul.f32 %v207, %v509
        %v519 = vperm.slane %v511, 0
        %v520 = vperm.slane %v511, 1
        %v521 = vperm.slane %v511, 2
        %v525 = vmul.f32 %v512, %v519
        %v526 = vmul.f32 %v513, %v520
        %v527 = vmul.f32 %v514, %v521
        %v528 = vmul.f32 %v515, %v519
        %v529 = vmul.f32 %v516, %v520
        %v530 = vmul.f32 %v517, %v521
        %531 = vst [vmem:[%s193] sm:$0xff] %v525
        %532 = vst [vmem:[%s193 + $0x8] sm:$0xff] %v526
        %533 = vst [vmem:[%s193 + $0x10] sm:$0xff] %v527
        %534 = vst [vmem:[%s193 + $0x18] sm:$0xff] %v528
        %535 = vst [vmem:[%s193 + $0x20] sm:$0xff] %v529
        %536 = vst [vmem:[%s193 + $0x28] sm:$0xff] %v530
        %s537 = sand.u32 %s115, 1
        %s538 = scalar_lea.sflag [#allocation3], %s537
        %s539 = sand.u32 %s115, 1
        %s540 = smul.addr %s539, 48
        %s541 = scalar_lea.vmem [#allocation2], %s540
        // Predicated region
        $region37: #{tpu_custom_call.1} parent=35 // pred_check
          %p542 = pneg %p125
        $region38: #{tpu_custom_call.1} parent=35 // pred_check_branch
          %544 = sbr.rel (%p542) target = $region40
        $region39: #{tpu_custom_call.1} parent=35 // pred_region
          %s545 = smul.u32 2, %s18
          %547 = vsyncadd %s538, 0
          %s548 = smul.addr %s545, 3
          %s549 = smul.addr %s548, 8
          %s550 = scalar_lea.hbm %s4, %s549
          %s551 = sshll.u32 %s541, 4
          %s552 = int_to_ptr.vmem [resolvable:$true] %s551
          %s553 = sshll.u32 %s550, 4
          %s554 = int_to_ptr.hbm [resolvable:$true] %s553
          %559 = dma.vmem_to_hbm [thread:$0]  %s552, 768, %s554, %s538, 384, 384, 24
        $region40: #{tpu_custom_call.1} parent=35 // pred_fallthru
          _
      $region36: #{tpu_custom_call.1} parent=5 // pred_fallthru
        _
      %p560 = scmp.le.s32.totalorder 2, %s13
      // Predicated region
      $region41: #{tpu_custom_call.1} parent=5 // pred_check
        %p561 = pneg %p560
      $region42: #{tpu_custom_call.1} parent=5 // pred_check_branch
        %563 = sbr.rel (%p561) target = $region44
      $region43: #{tpu_custom_call.1} parent=5 // pred_region
        %s564 = ssub.s32 %s13, 2
        // Predicated region
        $region45: #{tpu_custom_call.1} parent=43 // pred_check
          %p565 = pneg %p131
        $region46: #{tpu_custom_call.1} parent=43 // pred_check_branch
          %567 = sbr.rel (%p565) target = $region48
        $region47: #{tpu_custom_call.1} parent=43 // pred_region
          %s568 = sand.u32 %s116, 1
          %s569 = scalar_lea.sflag [#allocation3], %s568
          %s570 = sand.u32 %s116, 1
          %s571 = smul.addr %s570, 48
          %s572 = scalar_lea.vmem [#allocation2], %s571
          %574 = dma.done %s569, 768
        $region48: #{tpu_custom_call.1} parent=43 // pred_fallthru
          _
      $region44: #{tpu_custom_call.1} parent=5 // pred_fallthru
        _
    $region6: #{tpu_custom_call.1} parent=1 // loop_footer
      %s17 = sadd.s32 1, %s13
    $region7: #{tpu_custom_call.1} parent=1 // loop_footer_branch
      %12 = sbr.rel target = $region3
    $region8: #{tpu_custom_call.1} parent=1 // loop_exit
      _
    %575 = vsyncpa [#allocation3], 1
    %s576 = scalar_lea.sflag [#allocation3], 1
    %577 = vsyncpa %s576, 1

</llo_original>
